<compile_context>
chip_gen: v7x
topology: tpu7x:2x2x1
jax: 0.10.0
libtpu: 0.0.40
codegen_flags: <defaults>
</compile_context>

<pallas_src>
import math
import functools

import jax
import jax.numpy as jnp
from jax.experimental import pallas as pl
from jax.experimental.pallas import tpu as pltpu

BN_EPS = 1e-5
LANE = 128
SUBLANE = 8
BF16_PACK = 16                        # bf16 packs 16 sublanes per vreg
FUSED_VMEM_BUDGET = 44 * (1 << 20)    # conservative: v7x has only 64 MiB VMEM per TensorCore


def _round_up(x, m):
    return ((x + m - 1) // m) * m


# ----------------------------------------------------------------------------------------
# Fused kernel: grid = (phase, m-tile), both axes sequential ("arbitrary").
#   phase 0: y_tile = patches_tile @ w  (f32 MXU acc); y_tile kept resident in VMEM scratch,
#            per-channel sum / sum-of-squares accumulated in VMEM.
#   phase 1: (once, i==0) scale = rsqrt(var+eps), shift = -mean*scale; every step streams out
#            o_tile = y_tile * scale + shift  (pure FMA over the resident tile).
# ----------------------------------------------------------------------------------------
def _fused_conv_bn_kernel(p_ref, w_ref, o_ref,
                          y_vmem, sum_ref, ssq_ref, scale_ref, shift_ref,
                          *, block_m, inv_count):
    phase = pl.program_id(0)
    i = pl.program_id(1)
    row0 = pl.multiple_of(i * block_m, block_m)

    @pl.when(phase == 0)
    def _conv_and_stats():
        @pl.when(i == 0)
        def _():
            sum_ref[...] = jnp.zeros_like(sum_ref)
            ssq_ref[...] = jnp.zeros_like(ssq_ref)

        # Bias intentionally omitted: it cancels exactly under affine=False BatchNorm, and
        # without it the zero-padded rows contribute exactly 0 to sum / ssq (no masking).
        y = jnp.dot(p_ref[...], w_ref[...], preferred_element_type=jnp.float32)
        y_vmem[pl.ds(row0, block_m), :] = y
        sum_ref[...] += jnp.sum(y, axis=0, keepdims=True)
        ssq_ref[...] += jnp.sum(y * y, axis=0, keepdims=True)

    @pl.when(phase == 1)
    def _normalize():
        @pl.when(i == 0)
        def _():
            mean = sum_ref[...] * inv_count
            # TODO(synk): E[y^2]-E[y]^2 is cancellation-prone when |mean| >> std; for very
            # large M switch to a shifted / Welford-style combine.
            var = jnp.maximum(ssq_ref[...] * inv_count - mean * mean, 0.0)
            scale = jax.lax.rsqrt(var + BN_EPS)
            scale_ref[...] = scale
            shift_ref[...] = -mean * scale

        y = y_vmem[pl.ds(row0, block_m), :]
        o_ref[...] = (y * scale_ref[...] + shift_ref[...]).astype(o_ref.dtype)


# ----------------------------------------------------------------------------------------
# Fallback (conv output too large to keep resident in VMEM): two passes, bf16 intermediate.
# ----------------------------------------------------------------------------------------
def _conv_stats_kernel(p_ref, w_ref, y_ref, sum_ref, ssq_ref):
    i = pl.program_id(0)
    y = jnp.dot(p_ref[...], w_ref[...], preferred_element_type=jnp.float32)
    y_ref[...] = y.astype(y_ref.dtype)          # bf16 intermediate: half the HBM bytes of f32

    @pl.when(i == 0)
    def _():
        sum_ref[...] = jnp.zeros_like(sum_ref)
        ssq_ref[...] = jnp.zeros_like(ssq_ref)

    sum_ref[...] += jnp.sum(y, axis=0, keepdims=True)
    ssq_ref[...] += jnp.sum(y * y, axis=0, keepdims=True)


def _bn_normalize_kernel(y_ref, scale_ref, shift_ref, o_ref):
    o_ref[...] = (y_ref[...].astype(jnp.float32) * scale_ref[...]
                  + shift_ref[...]).astype(o_ref.dtype)


# ----------------------------------------------------------------------------------------
# Wrapper
# ----------------------------------------------------------------------------------------
def _im2col_nchw(x, k):
    # TODO(synk): replace with in-kernel shifted-window matmuls (NHWC tiles + (k-1)-row halo
    # DMA); im2col inflates conv input HBM traffic ~k*k times. Kept (in bf16) because it maps
    # directly onto rectangular BlockSpec tiles.
    N, C, H, W = x.shape
    Ho, Wo = H - k + 1, W - k + 1
    cols = []
    for i in range(k):
        for j in range(k):
            cols.append(x[:, :, i:i + Ho, j:j + Wo])   # [N, C, Ho, Wo]
    p = jnp.stack(cols, axis=2)                         # [N, C, k*k, Ho, Wo]
    p = p.transpose(0, 3, 4, 1, 2)                      # [N, Ho, Wo, C, k*k]
    return p.reshape(N * Ho * Wo, C * k * k), (N, Ho, Wo)


@functools.partial(jax.jit, static_argnames=("kernel_size", "block_m"))
def conv_bn_block(x, weight, bias=None, kernel_size=3, block_m=512):
    """Conv2d(k, stride=1, pad=0) + training-mode BatchNorm2d(affine=False).

    x: [N, Cin, H, W] f32 (NCHW), weight: [Cout, Cin, k, k], bias: [Cout] (ignored: a conv
    bias cancels exactly under affine=False BatchNorm). Returns [N, Cout, Ho, Wo] f32.

    block_m: im2col rows per grid step; 512+ keeps the streaming near the HBM roofline. On
    v7x (64 MiB VMEM/TC) keep block_m*Cp*4 B per pipelined buffer in mind when raising it.
    """
    del bias  # exact no-op under affine=False BN
    k = kernel_size
    Cout = weight.shape[0]

    patches, (N, Ho, Wo) = _im2col_nchw(x.astype(jnp.bfloat16), k)     # [M, K] bf16
    M, K = patches.shape

    block_m = min(block_m, _round_up(M, SUBLANE))
    Mp = _round_up(M, block_m)
    Kp = _round_up(K, BF16_PACK)              # bf16 sublane packing: 16 rows per vreg
    Cp = _round_up(Cout, LANE)                # lane-dense output / MXU columns
    nm = Mp // block_m

    patches = jnp.pad(patches, ((0, Mp - M), (0, Kp - K)))
    w2d = jnp.pad(weight.reshape(Cout, K).T,
                  ((0, Kp - K), (0, Cp - Cout))).astype(jnp.bfloat16)  # [Kp, Cp]

    inv_count = 1.0 / M

    # VMEM footprint of the fused (resident-y) variant.
    fused_vmem = (Mp * Cp * 4                 # resident conv output
                  + 2 * block_m * Kp * 2      # patch tiles (bf16, double-buffered)
                  + 2 * Kp * Cp * 2           # weights
                  + 2 * block_m * Cp * 4      # output tiles
                  + 4 * SUBLANE * Cp * 4)     # sum / ssq / scale / shift scratch
    use_fused = fused_vmem <= FUSED_VMEM_BUDGET

    if use_fused:
        vmem_limit = int(max(fused_vmem + (4 << 20), 32 << 20))
        out_pad = pl.pallas_call(
            functools.partial(_fused_conv_bn_kernel, block_m=block_m, inv_count=inv_count),
            grid=(2, nm),
            in_specs=[
                # Phase 1 pins the patch input to block 0, so its DMA degenerates to a single
                # (then skipped) fetch instead of re-streaming all patch tiles.
                pl.BlockSpec((block_m, Kp), lambda p, i: (i * (1 - p), 0)),
                pl.BlockSpec((Kp, Cp), lambda p, i: (0, 0)),
            ],
            out_specs=pl.BlockSpec((block_m, Cp), lambda p, i: (i * p, 0)),
            out_shape=jax.ShapeDtypeStruct((Mp, Cp), jnp.float32),
            scratch_shapes=[
                pltpu.VMEM((Mp, Cp), jnp.float32),   # resident conv output (no HBM round-trip)
                pltpu.VMEM((1, Cp), jnp.float32),    # per-channel sum
                pltpu.VMEM((1, Cp), jnp.float32),    # per-channel sum of squares
                pltpu.VMEM((1, Cp), jnp.float32),    # scale = rsqrt(var + eps)
                pltpu.VMEM((1, Cp), jnp.float32),    # shift = -mean * scale
            ],
            compiler_params=pltpu.CompilerParams(
                dimension_semantics=("arbitrary", "arbitrary"),
                vmem_limit_bytes=vmem_limit),
        )(patches, w2d)
    else:
        # TODO(synk): on v7x, split the stats pass across the 2 TensorCores (leading parallel
        # core axis with per-core partial sums) instead of running it on one core.
        tile_vmem = (2 * block_m * Kp * 2 + 2 * Kp * Cp * 2
                     + 2 * block_m * Cp * 2 + 4 * SUBLANE * Cp * 4)
        vmem_limit = int(max(tile_vmem + (4 << 20), 32 << 20))
        y_pad, ch_sum, ch_ssq = pl.pallas_call(
            _conv_stats_kernel,
            grid=(nm,),
            in_specs=[
                pl.BlockSpec((block_m, Kp), lambda i: (i, 0)),
                pl.BlockSpec((Kp, Cp), lambda i: (0, 0)),
            ],
            out_specs=[
                pl.BlockSpec((block_m, Cp), lambda i: (i, 0)),
                pl.BlockSpec((1, Cp), lambda i: (0, 0)),      # resident accumulators
                pl.BlockSpec((1, Cp), lambda i: (0, 0)),
            ],
            out_shape=[
                jax.ShapeDtypeStruct((Mp, Cp), jnp.bfloat16),
                jax.ShapeDtypeStruct((1, Cp), jnp.float32),
                jax.ShapeDtypeStruct((1, Cp), jnp.float32),
            ],
            compiler_params=pltpu.CompilerParams(
                dimension_semantics=("arbitrary",),
                vmem_limit_bytes=vmem_limit),
        )(patches, w2d)

        mean = ch_sum * inv_count
        var = jnp.maximum(ch_ssq * inv_count - mean * mean, 0.0)
        scale = jax.lax.rsqrt(var + BN_EPS)
        shift = -mean * scale

        out_pad = pl.pallas_call(
            _bn_normalize_kernel,
            grid=(nm,),
            in_specs=[
                pl.BlockSpec((block_m, Cp), lambda i: (i, 0)),
                pl.BlockSpec((1, Cp), lambda i: (0, 0)),
                pl.BlockSpec((1, Cp), lambda i: (0, 0)),
            ],
            out_specs=pl.BlockSpec((block_m, Cp), lambda i: (i, 0)),
            out_shape=jax.ShapeDtypeStruct((Mp, Cp), jnp.float32),
            compiler_params=pltpu.CompilerParams(
                dimension_semantics=("parallel",),
                vmem_limit_bytes=vmem_limit),
        )(y_pad, scale, shift)

    out = out_pad[:M, :Cout].reshape(N, Ho, Wo, Cout)
    # Keep the PyTorch module's NCHW output contract; consumers that accept NHWC should drop
    # this transpose (it is a full extra read+write of the output in XLA).
    return out.transpose(0, 3, 1, 2)


if __name__ == "__main__":
    # ConvBNBlock(in_channels=4, out_channels=8, padding=0, bias=True, stride=1, kernel_size=3)
    N, Cin, H, W = 2, 4, 16, 16
    Cout, K = 8, 3

    key = jax.random.PRNGKey(0)
    kx, kw, kb = jax.random.split(key, 3)
    x = jax.random.normal(kx, (N, Cin, H, W), dtype=jnp.float32)

    # Deterministic Conv2d-style init (uniform in +/- 1/sqrt(fan_in)).
    fan_in = Cin * K * K
    bound = 1.0 / math.sqrt(fan_in)
    weight = jax.random.uniform(kw, (Cout, Cin, K, K), jnp.float32, -bound, bound)
    bias = jax.random.uniform(kb, (Cout,), jnp.float32, -bound, bound)

    out = conv_bn_block(x, weight, bias, kernel_size=K)
    jax.block_until_ready(out)
    assert out.shape == (N, Cout, H - K + 1, W - K + 1)

    # Reference (f32 conv + bias + training-mode BN, affine=False). The kernel drops the bias,
    # which cancels exactly under affine=False BN; loose tol covers the bf16 matmul inputs.
    y_ref = jax.lax.conv_general_dilated(
        x, weight, window_strides=(1, 1), padding="VALID",
        dimension_numbers=("NCHW", "OIHW", "NCHW")) + bias.reshape(1, -1, 1, 1)
    mean = y_ref.mean(axis=(0, 2, 3), keepdims=True)
    var = ((y_ref - mean) ** 2).mean(axis=(0, 2, 3), keepdims=True)
    expected = (y_ref - mean) * jax.lax.rsqrt(var + BN_EPS)
    max_err = float(jnp.max(jnp.abs(out - expected)))
    assert max_err < 8e-2, f"max abs error {max_err}"

    print("KERNEL_OK")
</pallas_src>

<mosaic_0001>
module attributes {stable_mosaic.version = 11 : i64} {
  func.func @_fused_conv_bn_kernel(%arg0: i32, %arg1: i32, %arg2: memref<392x48xbf16, #tpu.memory_space<vmem>>, %arg3: memref<48x128xbf16, #tpu.memory_space<vmem>>, %arg4: memref<392x128xf32, #tpu.memory_space<vmem>>, %arg5: memref<392x128xf32, #tpu.memory_space<vmem>>, %arg6: memref<1x128xf32, #tpu.memory_space<vmem>>, %arg7: memref<1x128xf32, #tpu.memory_space<vmem>>, %arg8: memref<1x128xf32, #tpu.memory_space<vmem>>, %arg9: memref<1x128xf32, #tpu.memory_space<vmem>>) attributes {dimension_semantics = [#tpu.dimension_semantics<arbitrary>, #tpu.dimension_semantics<arbitrary>], iteration_bounds = array<i64: 2, 1>, scalar_prefetch = 0 : i64, scratch_operands = 5 : i64, tpu.core_type = #tpu.core_type<tc>, window_params = [{transform_indices = @transform_0, window_bounds = array<i64: 392, 48>}, {pipeline_mode = #tpu.pipeline_mode<synchronous>, transform_indices = @transform_1, window_bounds = array<i64: 48, 128>}, {transform_indices = @transform_2, window_bounds = array<i64: 392, 128>}]} {
    %c392_i32 = arith.constant 392 : i32
    %0 = arith.muli %arg1, %c392_i32 : i32
    %1 = tpu.assume_multiple %0, 392 : i32
    %c0_i32 = arith.constant 0 : i32
    %2 = arith.cmpi eq, %arg0, %c0_i32 : i32
    %3 = arith.extui %2 : i1 to i32
    %c0_i32_0 = arith.constant 0 : i32
    %4 = arith.cmpi ne, %3, %c0_i32_0 : i32
    scf.if %4 {
      %c0_i32_2 = arith.constant 0 : i32
      %8 = arith.cmpi eq, %arg1, %c0_i32_2 : i32
      %9 = arith.extui %8 : i1 to i32
      %c0_i32_3 = arith.constant 0 : i32
      %10 = arith.cmpi ne, %9, %c0_i32_3 : i32
      scf.if %10 {
        %cst_18 = arith.constant 0.000000e+00 : f32
        %27 = vector.broadcast %cst_18 : f32 to vector<1x128xf32>
        %c0_19 = arith.constant 0 : index
        %c0_20 = arith.constant 0 : index
        %28 = vector.load %arg6[%c0_19, %c0_20] : memref<1x128xf32, #tpu.memory_space<vmem>>, vector<1x128xf32>
        tpu.vector_store %arg6[%c0_19, %c0_20], %27 {strides = array<i32>} : memref<1x128xf32, #tpu.memory_space<vmem>>, vector<1x128xf32>,
        %cst_21 = arith.constant 0.000000e+00 : f32
        %29 = vector.broadcast %cst_21 : f32 to vector<1x128xf32>
        %c0_22 = arith.constant 0 : index
        %c0_23 = arith.constant 0 : index
        %30 = vector.load %arg7[%c0_22, %c0_23] : memref<1x128xf32, #tpu.memory_space<vmem>>, vector<1x128xf32>
        tpu.vector_store %arg7[%c0_22, %c0_23], %29 {strides = array<i32>} : memref<1x128xf32, #tpu.memory_space<vmem>>, vector<1x128xf32>,
      } else {
      }
      %c0 = arith.constant 0 : index
      %c0_4 = arith.constant 0 : index
      %11 = vector.load %arg2[%c0, %c0_4] : memref<392x48xbf16, #tpu.memory_space<vmem>>, vector<392x48xbf16>
      %c0_5 = arith.constant 0 : index
      %c0_6 = arith.constant 0 : index
      %12 = vector.load %arg3[%c0_5, %c0_6] : memref<48x128xbf16, #tpu.memory_space<vmem>>, vector<48x128xbf16>
      %cst = arith.constant dense<0.000000e+00> : vector<392x128xf32>
      %13 = tpu.matmul %11, %12, %cst {dimension_numbers = #tpu.dot_dimension_numbers<[1], [0], [0], [1], [0, 0, 1, 1], [], []>} : vector<392x48xbf16>, vector<48x128xbf16>, vector<392x128xf32> -> vector<392x128xf32>
      %14 = arith.index_cast %1 : i32 to index
      %c0_7 = arith.constant 0 : index
      %15 = vector.load %arg5[%14, %c0_7] : memref<392x128xf32, #tpu.memory_space<vmem>>, vector<392x128xf32>
      tpu.vector_store %arg5[%14, %c0_7], %13 {strides = array<i32>} : memref<392x128xf32, #tpu.memory_space<vmem>>, vector<392x128xf32>,
      %c0_8 = arith.constant 0 : index
      %c0_9 = arith.constant 0 : index
      %16 = vector.load %arg6[%c0_8, %c0_9] : memref<1x128xf32, #tpu.memory_space<vmem>>, vector<1x128xf32>
      %cst_10 = arith.constant dense<0.000000e+00> : vector<128xf32>
      %17 = vector.multi_reduction <add>, %13, %cst_10 [0] : vector<392x128xf32> to vector<128xf32>
      %18 = vector.shape_cast %17 : vector<128xf32> to vector<1x128xf32>
      %19 = arith.addf %16, %18 : vector<1x128xf32>
      %c0_11 = arith.constant 0 : index
      %c0_12 = arith.constant 0 : index
      %20 = vector.load %arg6[%c0_11, %c0_12] : memref<1x128xf32, #tpu.memory_space<vmem>>, vector<1x128xf32>
      tpu.vector_store %arg6[%c0_11, %c0_12], %19 {strides = array<i32>} : memref<1x128xf32, #tpu.memory_space<vmem>>, vector<1x128xf32>,
      %c0_13 = arith.constant 0 : index
      %c0_14 = arith.constant 0 : index
      %21 = vector.load %arg7[%c0_13, %c0_14] : memref<1x128xf32, #tpu.memory_space<vmem>>, vector<1x128xf32>
      %22 = arith.mulf %13, %13 : vector<392x128xf32>
      %cst_15 = arith.constant dense<0.000000e+00> : vector<128xf32>
      %23 = vector.multi_reduction <add>, %22, %cst_15 [0] : vector<392x128xf32> to vector<128xf32>
      %24 = vector.shape_cast %23 : vector<128xf32> to vector<1x128xf32>
      %25 = arith.addf %21, %24 : vector<1x128xf32>
      %c0_16 = arith.constant 0 : index
      %c0_17 = arith.constant 0 : index
      %26 = vector.load %arg7[%c0_16, %c0_17] : memref<1x128xf32, #tpu.memory_space<vmem>>, vector<1x128xf32>
      tpu.vector_store %arg7[%c0_16, %c0_17], %25 {strides = array<i32>} : memref<1x128xf32, #tpu.memory_space<vmem>>, vector<1x128xf32>,
    } else {
    }
    %c1_i32 = arith.constant 1 : i32
    %5 = arith.cmpi eq, %arg0, %c1_i32 : i32
    %6 = arith.extui %5 : i1 to i32
    %c0_i32_1 = arith.constant 0 : i32
    %7 = arith.cmpi ne, %6, %c0_i32_1 : i32
    scf.if %7 {
      %c0_i32_2 = arith.constant 0 : i32
      %8 = arith.cmpi eq, %arg1, %c0_i32_2 : i32
      %9 = arith.extui %8 : i1 to i32
      %c0_i32_3 = arith.constant 0 : i32
      %10 = arith.cmpi ne, %9, %c0_i32_3 : i32
      scf.if %10 {
        %c0_10 = arith.constant 0 : index
        %c0_11 = arith.constant 0 : index
        %20 = vector.load %arg6[%c0_10, %c0_11] : memref<1x128xf32, #tpu.memory_space<vmem>>, vector<1x128xf32>
        %cst = arith.constant 0.00255102036 : f32
        %21 = vector.broadcast %cst : f32 to vector<1x128xf32>
        %22 = arith.mulf %20, %21 : vector<1x128xf32>
        %c0_12 = arith.constant 0 : index
        %c0_13 = arith.constant 0 : index
        %23 = vector.load %arg7[%c0_12, %c0_13] : memref<1x128xf32, #tpu.memory_space<vmem>>, vector<1x128xf32>
        %cst_14 = arith.constant 0.00255102036 : f32
        %24 = vector.broadcast %cst_14 : f32 to vector<1x128xf32>
        %25 = arith.mulf %23, %24 : vector<1x128xf32>
        %26 = arith.mulf %22, %22 : vector<1x128xf32>
        %27 = arith.subf %25, %26 : vector<1x128xf32>
        %cst_15 = arith.constant 0.000000e+00 : f32
        %28 = vector.broadcast %cst_15 : f32 to vector<1x128xf32>
        %29 = arith.maximumf %27, %28 : vector<1x128xf32>
        %cst_16 = arith.constant 9.99999974E-6 : f32
        %30 = vector.broadcast %cst_16 : f32 to vector<1x128xf32>
        %31 = arith.addf %29, %30 : vector<1x128xf32>
        %32 = math.rsqrt %31 : vector<1x128xf32>
        %c0_17 = arith.constant 0 : index
        %c0_18 = arith.constant 0 : index
        %33 = vector.load %arg8[%c0_17, %c0_18] : memref<1x128xf32, #tpu.memory_space<vmem>>, vector<1x128xf32>
        tpu.vector_store %arg8[%c0_17, %c0_18], %32 {strides = array<i32>} : memref<1x128xf32, #tpu.memory_space<vmem>>, vector<1x128xf32>,
        %cst_19 = arith.constant 0.000000e+00 : f32
        %34 = vector.broadcast %cst_19 : f32 to vector<1x128xf32>
        %35 = arith.subf %34, %22 : vector<1x128xf32>
        %36 = arith.mulf %35, %32 : vector<1x128xf32>
        %c0_20 = arith.constant 0 : index
        %c0_21 = arith.constant 0 : index
        %37 = vector.load %arg9[%c0_20, %c0_21] : memref<1x128xf32, #tpu.memory_space<vmem>>, vector<1x128xf32>
        tpu.vector_store %arg9[%c0_20, %c0_21], %36 {strides = array<i32>} : memref<1x128xf32, #tpu.memory_space<vmem>>, vector<1x128xf32>,
      } else {
      }
      %11 = arith.index_cast %1 : i32 to index
      %c0 = arith.constant 0 : index
      %12 = vector.load %arg5[%11, %c0] : memref<392x128xf32, #tpu.memory_space<vmem>>, vector<392x128xf32>
      %c0_4 = arith.constant 0 : index
      %c0_5 = arith.constant 0 : index
      %13 = vector.load %arg8[%c0_4, %c0_5] : memref<1x128xf32, #tpu.memory_space<vmem>>, vector<1x128xf32>
      %14 = vector.broadcast %13 : vector<1x128xf32> to vector<392x128xf32>
      %15 = arith.mulf %12, %14 : vector<392x128xf32>
      %c0_6 = arith.constant 0 : index
      %c0_7 = arith.constant 0 : index
      %16 = vector.load %arg9[%c0_6, %c0_7] : memref<1x128xf32, #tpu.memory_space<vmem>>, vector<1x128xf32>
      %17 = vector.broadcast %16 : vector<1x128xf32> to vector<392x128xf32>
      %18 = arith.addf %15, %17 : vector<392x128xf32>
      %c0_8 = arith.constant 0 : index
      %c0_9 = arith.constant 0 : index
      %19 = vector.load %arg4[%c0_8, %c0_9] : memref<392x128xf32, #tpu.memory_space<vmem>>, vector<392x128xf32>
      tpu.vector_store %arg4[%c0_8, %c0_9], %18 {strides = array<i32>} : memref<392x128xf32, #tpu.memory_space<vmem>>, vector<392x128xf32>,
    } else {
    }
    return
  }
  func.func @transform_0(%arg0: i32, %arg1: i32) -> (i32, i32) {
    %c1_i32 = arith.constant 1 : i32
    %0 = arith.subi %c1_i32, %arg0 : i32
    %1 = arith.muli %arg1, %0 : i32
    %c0_i32 = arith.constant 0 : i32
    %c0_i32_0 = arith.constant 0 : i32
    return %1, %c0_i32 : i32, i32
  }
  func.func @transform_1(%arg0: i32, %arg1: i32) -> (i32, i32) {
    %c0_i32 = arith.constant 0 : i32
    %c0_i32_0 = arith.constant 0 : i32
    %c0_i32_1 = arith.constant 0 : i32
    return %c0_i32, %c0_i32_0 : i32, i32
  }
  func.func @transform_2(%arg0: i32, %arg1: i32) -> (i32, i32) {
    %0 = arith.muli %arg1, %arg0 : i32
    %c0_i32 = arith.constant 0 : i32
    %c0_i32_0 = arith.constant 0 : i32
    return %0, %c0_i32 : i32, i32
  }
}

</mosaic_0001>

<llo_original>
// kernel: conv_bn_block.1
$region0: #{conv_bn_block.1}
  #allocation0 [shape = 'u32[]', space=smem, size = 0x4, offset = 0x4, fixed_abs, tag = 'smem constant byte address 0x4 - core index']
  #allocation1 [shape = 'u32[144,128]{1,0:T(1,128)}', space=vmem, size = 0x12000, scoped, tag = 'internal scratch']
  #allocation2 [shape = 'f32[392,128]{1,0:T(8,128)}', space=vmem, size = 0x31000, scoped, tag = 'scratch operand']
  #allocation3 [shape = 'f32[1,128]{1,0:T(1,128)}', space=vmem, size = 0x200, scoped, tag = 'scratch operand']
  #allocation4 [shape = 'f32[1,128]{1,0:T(1,128)}', space=vmem, size = 0x200, scoped, tag = 'scratch operand']
  #allocation5 [shape = 'f32[1,128]{1,0:T(1,128)}', space=vmem, size = 0x200, scoped, tag = 'scratch operand']
  #allocation6 [shape = 'f32[1,128]{1,0:T(1,128)}', space=vmem, size = 0x200, scoped, tag = 'scratch operand']
  %s0 = inlined_call_operand.vmem [shape: bf16[392,48], index: 0, kind: input, shape index: {}]
  %s1 = inlined_call_operand.vmem [shape: bf16[48,128], index: 1, kind: input, shape index: {}]
  %s2 = inlined_call_operand.vmem [shape: f32[392,128], index: 2, kind: output, shape index: {}]
  %s3 = sld [smem:[#allocation0]]
  $region57: #{conv_bn_block.1} parent=0
    _
  %s5 = ssub.s32 1, %s3
  %s6 = scalar_select 0, %s5, %s3
  loop: start=0, step=1, limit=4
  $region2: #{conv_bn_block.1} parent=0 // loop_pre_header
    _
  $region3: #{conv_bn_block.1} parent=0 // loop_header
    %s8 = sphi 0, %s12
    %p9 = scmp.ge.s32.totalorder %s8, 4
    %s15 = sphi 0, %s27
    %s16 = sphi 0, %s23
    %s17 = sphi 0, %s15
    %s18 = sphi 0, %s16
    %s19 = sphi 0, %s17
    %s20 = sphi 0, %s18
    %s34 = sphi 0, %s36
    %s37 = sphi 0, %s34
    %s38 = sphi 0, %s37
    %s54 = sphi 0, %s38
    %s58 = sphi 0, %s58
    %s60 = sphi 0, %s58
    %s61 = sphi 0, %s60
    %s75 = sphi 0, %s61
    %s83 = sphi 0, %s85
    %s86 = sphi 0, %s83
    %s87 = sphi 0, %s86
    %s103 = sphi 0, %s87
  $region4: #{conv_bn_block.1} parent=0 // loop_header_branch
    %11 = sbr.rel (%p9) target = $region8
  $region5: #{conv_bn_block.1} parent=0 // loop_body
    %s13 = ssub.s32 %s8, 1
    %s14 = ssub.s32 %s8, 2
    %s21 = sadd.s32 1, %s16
    %p22 = scmp.ge.s32.totalorder %s21, 1
    %s23 = scalar_select %p22, 0, %s21
    %s24 = sadd.s32 1, %s15
    %s25 = scalar_select %p22, %s24, %s15
    %p26 = scmp.ge.s32.totalorder %s25, 2
    %s27 = scalar_select %p26, 0, %s25
    %s28 = ssub.s32 1, %s15
    %s29 = smul.u32 %s16, %s28
    %s30 = ssub.s32 1, %s27
    %s31 = smul.u32 %s23, %s30
    %s32 = ssub.s32 %s29, %s31
    %p33 = scmp.eq.s32.totalorder %s32, 0
    %s35 = sadd.s32 %s34, 1
    %s36 = scalar_select %p33, %s34, %s35
    %p39 = pneg %p33
    %p40 = scmp.eq.s32.totalorder %s8, 1
    %p41 = por %p39, %p40
    %p42 = scmp.ne.s32.totalorder %s34, %s37
    %p43 = scmp.eq.s32.totalorder %s8, 0
    %p44 = por %p42, %p43
    %p45 = scmp.ne.s32.totalorder %s34, %s37
    %p46 = scmp.eq.s32.totalorder %s13, 1
    %p47 = por %p45, %p46
    %p48 = scmp.ne.s32.totalorder %s37, %s38
    %p49 = scmp.eq.s32.totalorder %s13, 0
    %p50 = por %p48, %p49
    %p51 = scmp.ne.s32.totalorder %s37, %s38
    %p52 = scmp.eq.s32.totalorder %s14, 1
    %p53 = por %p51, %p52
    %p55 = scmp.ne.s32.totalorder %s38, %s54
    %p56 = scmp.eq.s32.totalorder %s14, 0
    %p57 = por %p55, %p56
    %s59 = sadd.s32 %s58, 1
    %p62 = scmp.eq.s32.totalorder %s8, 1
    %p63 = scmp.ne.s32.totalorder %s58, %s60
    %p64 = scmp.eq.s32.totalorder %s8, 0
    %p65 = por %p63, %p64
    %p66 = scmp.ne.s32.totalorder %s58, %s60
    %p67 = scmp.eq.s32.totalorder %s13, 1
    %p68 = por %p66, %p67
    %p69 = scmp.ne.s32.totalorder %s60, %s61
    %p70 = scmp.eq.s32.totalorder %s13, 0
    %p71 = por %p69, %p70
    %p72 = scmp.ne.s32.totalorder %s60, %s61
    %p73 = scmp.eq.s32.totalorder %s14, 1
    %p74 = por %p72, %p73
    %p76 = scmp.ne.s32.totalorder %s61, %s75
    %p77 = scmp.eq.s32.totalorder %s14, 0
    %p78 = por %p76, %p77
    %s79 = smul.u32 %s16, %s15
    %s80 = smul.u32 %s23, %s27
    %s81 = ssub.s32 %s79, %s80
    %p82 = scmp.eq.s32.totalorder %s81, 0
    %s84 = sadd.s32 %s83, 1
    %s85 = scalar_select %p82, %s83, %s84
    %p88 = pneg %p82
    %p89 = scmp.eq.s32.totalorder %s8, 1
    %p90 = por %p88, %p89
    %p91 = scmp.ne.s32.totalorder %s83, %s86
    %p92 = scmp.eq.s32.totalorder %s8, 0
    %p93 = por %p91, %p92
    %p94 = scmp.ne.s32.totalorder %s83, %s86
    %p95 = scmp.eq.s32.totalorder %s13, 1
    %p96 = por %p94, %p95
    %p97 = scmp.ne.s32.totalorder %s86, %s87
    %p98 = scmp.eq.s32.totalorder %s13, 0
    %p99 = por %p97, %p98
    %p100 = scmp.ne.s32.totalorder %s86, %s87
    %p101 = scmp.eq.s32.totalorder %s14, 1
    %p102 = por %p100, %p101
    %p104 = scmp.ne.s32.totalorder %s87, %s103
    %p105 = scmp.eq.s32.totalorder %s14, 0
    %p106 = por %p104, %p105
    %p107 = scmp.le.s32.totalorder 1, %s8
    %p108 = scmp.lt.s32.totalorder %s8, 3
    %p109 = pnand %p107, %p108
    %p110 = pneg %p109
    // Predicated region
    $region9: #{conv_bn_block.1} parent=5 // pred_check
      _
    $region10: #{conv_bn_block.1} parent=5 // pred_check_branch
      %112 = sbr.rel (%p109) target = $region12
    $region11: #{conv_bn_block.1} parent=5 // pred_region
      %s113 = ssub.s32 %s8, 1
      // Predicated region
      $region13: #{conv_bn_block.1} parent=11 // pred_check
        %p114 = pneg %p71
      $region14: #{conv_bn_block.1} parent=11 // pred_check_branch
        %116 = sbr.rel (%p114) target = $region16
      $region15: #{conv_bn_block.1} parent=11 // pred_region
        _
      $region16: #{conv_bn_block.1} parent=11 // pred_fallthru
        _
    $region12: #{conv_bn_block.1} parent=5 // pred_fallthru
      _
    %p117 = scmp.lt.s32.totalorder %s8, 2
    // Predicated region
    $region17: #{conv_bn_block.1} parent=5 // pred_check
      %p118 = pneg %p117
    $region18: #{conv_bn_block.1} parent=5 // pred_check_branch
      %120 = sbr.rel (%p118) target = $region20
    $region19: #{conv_bn_block.1} parent=5 // pred_region
      // Predicated region
      $region21: #{conv_bn_block.1} parent=19 // pred_check
        %p121 = pneg %p44
      $region22: #{conv_bn_block.1} parent=19 // pred_check_branch
        %123 = sbr.rel (%p121) target = $region24
      $region23: #{conv_bn_block.1} parent=19 // pred_region
        %s124 = ssub.s32 1, %s15
        %s125 = smul.u32 %s16, %s124
        %s126 = smul.u32 49, %s125
        %p127 = scmp.lt.s32.totalorder %s126, 48
        %s128 = scalar_select %p127, %s126, 48
        %s129 = smul.addr %s128, 4
        %s130 = scalar_lea.vmem %s0, %s129
        %s131 = ssub.s32 1, %s15
        %s132 = smul.u32 %s16, %s131
        %s133 = smul.u32 49, %s132
      $region24: #{conv_bn_block.1} parent=19 // pred_fallthru
        _
    $region20: #{conv_bn_block.1} parent=5 // pred_fallthru
      _
    %p134 = scmp.le.s32.totalorder 1, %s8
    %p135 = scmp.lt.s32.totalorder %s8, 3
    %p136 = pnand %p134, %p135
    %p137 = pneg %p136
    // Predicated region
    $region25: #{conv_bn_block.1} parent=5 // pred_check
      _
    $region26: #{conv_bn_block.1} parent=5 // pred_check_branch
      %139 = sbr.rel (%p136) target = $region28
    $region27: #{conv_bn_block.1} parent=5 // pred_region
      %s140 = ssub.s32 %s8, 1
      %s141 = ssub.s32 1, %s17
      %s142 = smul.u32 %s18, %s141
      %s143 = smul.u32 49, %s142
      %p144 = scmp.lt.s32.totalorder %s143, 48
      %s145 = scalar_select %p144, %s143, 48
      %s146 = smul.addr %s145, 4
      %s147 = scalar_lea.vmem %s0, %s146
      %p148 = pneg %p50
      %p149 = pneg %p47
      %p150 = pneg %p71
      %p151 = pneg %p68
      %p152 = pneg %p99
      %p153 = pneg %p96
      %s154 = smul.u32 %s18, %s17
      %s155 = smul.u32 49, %s154
      %p156 = scmp.lt.s32.totalorder %s155, 48
      %s157 = scalar_select %p156, %s155, 48
      %s158 = smul.addr %s157, 8
      %s159 = scalar_lea.vmem %s2, %s158
      %s160 = ssub.s32 1, %s17
      %s161 = smul.u32 %s18, %s160
      %s162 = smul.u32 49, %s161
      %p163 = scmp.lt.s32.totalorder %s162, 48
      %s164 = scalar_select %p163, %s162, 48
      %s165 = smul.addr %s164, 4
      %s166 = scalar_lea.vmem %s0, %s165
      %s167 = ssub.s32 1, %s17
      %s168 = smul.u32 %s18, %s167
      %s169 = smul.u32 49, %s168
      %s170 = smul.u32 %s18, %s17
      %s171 = smul.u32 49, %s170
      %p172 = scmp.lt.s32.totalorder %s171, 48
      %s173 = scalar_select %p172, %s171, 48
      %s174 = smul.addr %s173, 8
      %s175 = scalar_lea.vmem %s2, %s174
      %s176 = smul.u32 %s18, %s17
      %s177 = smul.u32 49, %s176
      %s179 = smul.u32 %s18, 392
      %p180 = scmp.eq.s32.totalorder %s17, 0
      // Predicated region
      $region29: #{conv_bn_block.1} parent=27 // pred_check
        %p181 = pneg %p180
      $region30: #{conv_bn_block.1} parent=27 // pred_check_branch
        %183 = sbr.rel (%p181) target = $region32
      $region31: #{conv_bn_block.1} parent=27 // pred_region
        %p184 = scmp.eq.s32.totalorder %s18, 0
        // Predicated region
        $region33: #{conv_bn_block.1} parent=31 // pred_check
          %p185 = pneg %p184
        $region34: #{conv_bn_block.1} parent=31 // pred_check_branch
          %187 = sbr.rel (%p185) target = $region36
        $region35: #{conv_bn_block.1} parent=31 // pred_region
          %188 = vst [vmem:[#allocation3] sm:$0x1] 0.0
          %189 = vst [vmem:[#allocation4] sm:$0x1] 0.0
        $region36: #{conv_bn_block.1} parent=31 // pred_fallthru
          _
        %v190 = vld [vmem:[%s166] sm:$0xf]
        %v191 = vld [vmem:[%s166 + $0x4] sm:$0xf]
        %v192 = vld [vmem:[%s166 + $0x8] sm:$0xf]
        %v193 = vld [vmem:[%s166 + $0xc] sm:$0xf]
        %v194 = vld [vmem:[%s166 + $0x10] sm:$0xf]
        %v195 = vld [vmem:[%s166 + $0x14] sm:$0xf]
        %v196 = vld [vmem:[%s166 + $0x18] sm:$0xf]
        %v197 = vld [vmem:[%s166 + $0x1c] sm:$0xf]
        %v198 = vld [vmem:[%s166 + $0x20] sm:$0xf]
        %v199 = vld [vmem:[%s166 + $0x24] sm:$0xf]
        %v200 = vld [vmem:[%s166 + $0x28] sm:$0xf]
        %v201 = vld [vmem:[%s166 + $0x2c] sm:$0xf]
        %v202 = vld [vmem:[%s166 + $0x30] sm:$0xf]
        %v203 = vld [vmem:[%s166 + $0x34] sm:$0xf]
        %v204 = vld [vmem:[%s166 + $0x38] sm:$0xf]
        %v205 = vld [vmem:[%s166 + $0x3c] sm:$0xf]
        %v206 = vld [vmem:[%s166 + $0x40] sm:$0xf]
        %v207 = vld [vmem:[%s166 + $0x44] sm:$0xf]
        %v208 = vld [vmem:[%s166 + $0x48] sm:$0xf]
        %v209 = vld [vmem:[%s166 + $0x4c] sm:$0xf]
        %v210 = vld [vmem:[%s166 + $0x50] sm:$0xf]
        %v211 = vld [vmem:[%s166 + $0x54] sm:$0xf]
        %v212 = vld [vmem:[%s166 + $0x58] sm:$0xf]
        %v213 = vld [vmem:[%s166 + $0x5c] sm:$0xf]
        %v214 = vld [vmem:[%s166 + $0x60] sm:$0xf]
        %v215 = vld [vmem:[%s166 + $0x64] sm:$0xf]
        %v216 = vld [vmem:[%s166 + $0x68] sm:$0xf]
        %v217 = vld [vmem:[%s166 + $0x6c] sm:$0xf]
        %v218 = vld [vmem:[%s166 + $0x70] sm:$0xf]
        %v219 = vld [vmem:[%s166 + $0x74] sm:$0xf]
        %v220 = vld [vmem:[%s166 + $0x78] sm:$0xf]
        %v221 = vld [vmem:[%s166 + $0x7c] sm:$0xf]
        %v222 = vld [vmem:[%s166 + $0x80] sm:$0xf]
        %v223 = vld [vmem:[%s166 + $0x84] sm:$0xf]
        %v224 = vld [vmem:[%s166 + $0x88] sm:$0xf]
        %v225 = vld [vmem:[%s166 + $0x8c] sm:$0xf]
        %v226 = vld [vmem:[%s166 + $0x90] sm:$0xf]
        %v227 = vld [vmem:[%s166 + $0x94] sm:$0xf]
        %v228 = vld [vmem:[%s166 + $0x98] sm:$0xf]
        %v229 = vld [vmem:[%s166 + $0x9c] sm:$0xf]
        %v230 = vld [vmem:[%s166 + $0xa0] sm:$0xf]
        %v231 = vld [vmem:[%s166 + $0xa4] sm:$0xf]
        %v232 = vld [vmem:[%s166 + $0xa8] sm:$0xf]
        %v233 = vld [vmem:[%s166 + $0xac] sm:$0xf]
        %v234 = vld [vmem:[%s166 + $0xb0] sm:$0xf]
        %v235 = vld [vmem:[%s166 + $0xb4] sm:$0xf]
        %v236 = vld [vmem:[%s166 + $0xb8] sm:$0xf]
        %v237 = vld [vmem:[%s166 + $0xbc] sm:$0xf]
        %v238 = vld [vmem:[%s166 + $0xc0] sm:$0xf]
        %v239 = vld [vmem:[%s1] sm:$0xf]
        %v240 = vld [vmem:[%s1 + $0x4] sm:$0xf]
        %v241 = vld [vmem:[%s1 + $0x8] sm:$0xf]
        %v242 = vld [vmem:[%s1 + $0xc] sm:$0xf]
        %v243 = vld [vmem:[%s1 + $0x10] sm:$0xf]
        %v244 = vld [vmem:[%s1 + $0x14] sm:$0xf]
        %v294 = vunpack.c.l.b16 %v190
        %v295 = vunpack.c.l.b16 %v191
        %v296 = vunpack.c.l.b16 %v192
        %v297 = vunpack.c.l.b16 %v193
        %v298 = vunpack.c.l.b16 %v194
        %v299 = vunpack.c.l.b16 %v195
        %v300 = vunpack.c.l.b16 %v196
        %v301 = vunpack.c.l.b16 %v197
        %v302 = vunpack.c.l.b16 %v198
        %v303 = vunpack.c.l.b16 %v199
        %v304 = vunpack.c.l.b16 %v200
        %v305 = vunpack.c.l.b16 %v201
        %v306 = vunpack.c.l.b16 %v202
        %v307 = vunpack.c.l.b16 %v203
        %v308 = vunpack.c.l.b16 %v204
        %v309 = vunpack.c.l.b16 %v205
        %v310 = vunpack.c.l.b16 %v206
        %v311 = vunpack.c.l.b16 %v207
        %v312 = vunpack.c.l.b16 %v208
        %v313 = vunpack.c.l.b16 %v209
        %v314 = vunpack.c.l.b16 %v210
        %v315 = vunpack.c.l.b16 %v211
        %v316 = vunpack.c.l.b16 %v212
        %v317 = vunpack.c.l.b16 %v213
        %v318 = vunpack.c.l.b16 %v214
        %v319 = vunpack.c.l.b16 %v215
        %v320 = vunpack.c.l.b16 %v216
        %v321 = vunpack.c.l.b16 %v217
        %v322 = vunpack.c.l.b16 %v218
        %v323 = vunpack.c.l.b16 %v219
        %v324 = vunpack.c.l.b16 %v220
        %v325 = vunpack.c.l.b16 %v221
        %v326 = vunpack.c.l.b16 %v222
        %v327 = vunpack.c.l.b16 %v223
        %v328 = vunpack.c.l.b16 %v224
        %v329 = vunpack.c.l.b16 %v225
        %v330 = vunpack.c.l.b16 %v226
        %v331 = vunpack.c.l.b16 %v227
        %v332 = vunpack.c.l.b16 %v228
        %v333 = vunpack.c.l.b16 %v229
        %v334 = vunpack.c.l.b16 %v230
        %v335 = vunpack.c.l.b16 %v231
        %v336 = vunpack.c.l.b16 %v232
        %v337 = vunpack.c.l.b16 %v233
        %v338 = vunpack.c.l.b16 %v234
        %v339 = vunpack.c.l.b16 %v235
        %v340 = vunpack.c.l.b16 %v236
        %v341 = vunpack.c.l.b16 %v237
        %v342 = vunpack.c.l.b16 %v238
        %v343 = vpack.c.b16 %v295, %v294
        %v344 = vpack.c.b16 %v297, %v296
        %v345 = vpack.c.b16 %v299, %v298
        %v346 = vpack.c.b16 %v301, %v300
        %v347 = vpack.c.b16 %v303, %v302
        %v348 = vpack.c.b16 %v305, %v304
        %v349 = vpack.c.b16 %v307, %v306
        %v350 = vpack.c.b16 %v309, %v308
        %v351 = vpack.c.b16 %v311, %v310
        %v352 = vpack.c.b16 %v313, %v312
        %v353 = vpack.c.b16 %v315, %v314
        %v354 = vpack.c.b16 %v317, %v316
        %v355 = vpack.c.b16 %v319, %v318
        %v356 = vpack.c.b16 %v321, %v320
        %v357 = vpack.c.b16 %v323, %v322
        %v358 = vpack.c.b16 %v325, %v324
        %v359 = vpack.c.b16 %v327, %v326
        %v360 = vpack.c.b16 %v329, %v328
        %v361 = vpack.c.b16 %v331, %v330
        %v362 = vpack.c.b16 %v333, %v332
        %v363 = vpack.c.b16 %v335, %v334
        %v364 = vpack.c.b16 %v337, %v336
        %v365 = vpack.c.b16 %v339, %v338
        %v366 = vpack.c.b16 %v341, %v340
        %v367 = vpack.c.b16 %v342, %v342
        %v374 = vunpack.c.l.b16 %v239
        %v375 = vunpack.c.l.b16 %v240
        %v376 = vunpack.c.l.b16 %v241
        %v377 = vunpack.c.l.b16 %v242
        %v378 = vunpack.c.l.b16 %v243
        %v379 = vunpack.c.l.b16 %v244
        %v380 = vpack.c.b16 %v375, %v374
        %v381 = vpack.c.b16 %v377, %v376
        %v382 = vpack.c.b16 %v379, %v378
        %vm386 = vcmask 392192
        %v388 = vsel %vm386, %v343, 0
        %v391 = vsel %vm386, %v344, 0
        %v394 = vsel %vm386, %v345, 0
        %v397 = vsel %vm386, %v346, 0
        %v400 = vsel %vm386, %v347, 0
        %v403 = vsel %vm386, %v348, 0
        %v406 = vsel %vm386, %v349, 0
        %v409 = vsel %vm386, %v350, 0
        %v412 = vsel %vm386, %v351, 0
        %v415 = vsel %vm386, %v352, 0
        %v418 = vsel %vm386, %v353, 0
        %v421 = vsel %vm386, %v354, 0
        %v424 = vsel %vm386, %v355, 0
        %v427 = vsel %vm386, %v356, 0
        %v430 = vsel %vm386, %v357, 0
        %v433 = vsel %vm386, %v358, 0
        %v436 = vsel %vm386, %v359, 0
        %v439 = vsel %vm386, %v360, 0
        %v442 = vsel %vm386, %v361, 0
        %v445 = vsel %vm386, %v362, 0
        %v448 = vsel %vm386, %v363, 0
        %v451 = vsel %vm386, %v364, 0
        %v454 = vsel %vm386, %v365, 0
        %v457 = vsel %vm386, %v366, 0
        %v460 = vsel %vm386, %v367, 0
        %462 = vmatprep.subr.bf16.mxu0 0
        %463 = vmatpush1.bf16.msra.mxu0 %v380
        %464 = vmatprep.subr.bf16.mxu0 0
        %465 = vmatpush1.bf16.msra.mxu0 %v381
        %466 = vmatprep.subr.bf16.mxu0 0
        %467 = vmatpush1.bf16.msra.mxu0 %v382
        %468 = vmatprep.subr.bf16.mxu0 0
        %469 = vmatpush1.bf16.msra.mxu0 0
        %470 = vmatprep.subr.bf16.mxu0 0
        %471 = vmatpush1.bf16.msra.mxu0 0
        %472 = vmatprep.subr.bf16.mxu0 0
        %473 = vmatpush1.bf16.msra.mxu0 0
        %474 = vmatprep.subr.bf16.mxu0 0
        %475 = vmatpush1.bf16.msra.mxu0 0
        %476 = vmatprep.subr.bf16.mxu0 0
        %477 = vmatpush1.bf16.msra.mxu0 0
        %478 = vmatprep.subr.bf16.mxu0 0
        %479 = vmatpush1.bf16.msra.mxu0 0
        %480 = vmatprep.subr.bf16.mxu0 0
        %481 = vmatpush1.bf16.msra.mxu0 0
        %482 = vmatprep.subr.bf16.mxu0 0
        %483 = vmatpush1.bf16.msra.mxu0 0
        %484 = vmatprep.subr.bf16.mxu0 0
        %485 = vmatpush1.bf16.msra.mxu0 0
        %486 = vmatprep.subr.bf16.mxu0 0
        %487 = vmatpush1.bf16.msra.mxu0 0
        %488 = vmatprep.subr.bf16.mxu0 0
        %489 = vmatpush1.bf16.msra.mxu0 0
        %490 = vmatprep.subr.bf16.mxu0 0
        %491 = vmatpush1.bf16.msra.mxu0 0
        %492 = vmatprep.subr.bf16.mxu0 0
        %493 = vmatpush1.bf16.msra.mxu0 0
        %494 = vmatprep.mubr.bf16.mxu0 0
        %495 = vmatmul.mubr.bf16.gmra.mrb[0].mxu0 %v388
        %v496 = vpop.f32.mrb[0].mxu0
        %v497 = vadd.f32 0.0, %v496
        %v498 = vpop.f32.mrb[0].mxu0
        %v499 = vpop.f32.mrb[0].mxu0
        %v500 = vadd.f32 0.0, %v499
        %v501 = vpop.f32.mrb[0].mxu0
        %502 = vmatprep.mubr.bf16.mxu0 0
        %503 = vmatmul.mubr.bf16.gmra.mrb[0].mxu0 %v391
        %v504 = vpop.f32.mrb[0].mxu0
        %v505 = vadd.f32 0.0, %v504
        %v506 = vpop.f32.mrb[0].mxu0
        %v507 = vpop.f32.mrb[0].mxu0
        %v508 = vadd.f32 0.0, %v507
        %v509 = vpop.f32.mrb[0].mxu0
        %510 = vmatprep.mubr.bf16.mxu0 0
        %511 = vmatmul.mubr.bf16.gmra.mrb[0].mxu0 %v394
        %v512 = vpop.f32.mrb[0].mxu0
        %v513 = vadd.f32 0.0, %v512
        %v514 = vpop.f32.mrb[0].mxu0
        %v515 = vpop.f32.mrb[0].mxu0
        %v516 = vadd.f32 0.0, %v515
        %v517 = vpop.f32.mrb[0].mxu0
        %518 = vmatprep.mubr.bf16.mxu0 0
        %519 = vmatmul.mubr.bf16.gmra.mrb[0].mxu0 %v397
        %v520 = vpop.f32.mrb[0].mxu0
        %v521 = vadd.f32 0.0, %v520
        %v522 = vpop.f32.mrb[0].mxu0
        %v523 = vpop.f32.mrb[0].mxu0
        %v524 = vadd.f32 0.0, %v523
        %v525 = vpop.f32.mrb[0].mxu0
        %526 = vmatprep.mubr.bf16.mxu0 0
        %527 = vmatmul.mubr.bf16.gmra.mrb[0].mxu0 %v400
        %v528 = vpop.f32.mrb[0].mxu0
        %v529 = vadd.f32 0.0, %v528
        %v530 = vpop.f32.mrb[0].mxu0
        %v531 = vpop.f32.mrb[0].mxu0
        %v532 = vadd.f32 0.0, %v531
        %v533 = vpop.f32.mrb[0].mxu0
        %534 = vmatprep.mubr.bf16.mxu0 0
        %535 = vmatmul.mubr.bf16.gmra.mrb[0].mxu0 %v403
        %v536 = vpop.f32.mrb[0].mxu0
        %v537 = vadd.f32 0.0, %v536
        %v538 = vpop.f32.mrb[0].mxu0
        %v539 = vpop.f32.mrb[0].mxu0
        %v540 = vadd.f32 0.0, %v539
        %v541 = vpop.f32.mrb[0].mxu0
        %542 = vmatprep.mubr.bf16.mxu0 0
        %543 = vmatmul.mubr.bf16.gmra.mrb[0].mxu0 %v406
        %v544 = vpop.f32.mrb[0].mxu0
        %v545 = vadd.f32 0.0, %v544
        %v546 = vpop.f32.mrb[0].mxu0
        %v547 = vpop.f32.mrb[0].mxu0
        %v548 = vadd.f32 0.0, %v547
        %v549 = vpop.f32.mrb[0].mxu0
        %550 = vmatprep.mubr.bf16.mxu0 0
        %551 = vmatmul.mubr.bf16.gmra.mrb[0].mxu0 %v409
        %v552 = vpop.f32.mrb[0].mxu0
        %v553 = vadd.f32 0.0, %v552
        %v554 = vpop.f32.mrb[0].mxu0
        %v555 = vpop.f32.mrb[0].mxu0
        %v556 = vadd.f32 0.0, %v555
        %v557 = vpop.f32.mrb[0].mxu0
        %558 = vmatprep.mubr.bf16.mxu0 0
        %559 = vmatmul.mubr.bf16.gmra.mrb[0].mxu0 %v412
        %v560 = vpop.f32.mrb[0].mxu0
        %v561 = vadd.f32 0.0, %v560
        %v562 = vpop.f32.mrb[0].mxu0
        %v563 = vpop.f32.mrb[0].mxu0
        %v564 = vadd.f32 0.0, %v563
        %v565 = vpop.f32.mrb[0].mxu0
        %566 = vmatprep.mubr.bf16.mxu0 0
        %567 = vmatmul.mubr.bf16.gmra.mrb[0].mxu0 %v415
        %v568 = vpop.f32.mrb[0].mxu0
        %v569 = vadd.f32 0.0, %v568
        %v570 = vpop.f32.mrb[0].mxu0
        %v571 = vpop.f32.mrb[0].mxu0
        %v572 = vadd.f32 0.0, %v571
        %v573 = vpop.f32.mrb[0].mxu0
        %574 = vmatprep.mubr.bf16.mxu0 0
        %575 = vmatmul.mubr.bf16.gmra.mrb[0].mxu0 %v418
        %v576 = vpop.f32.mrb[0].mxu0
        %v577 = vadd.f32 0.0, %v576
        %v578 = vpop.f32.mrb[0].mxu0
        %v579 = vpop.f32.mrb[0].mxu0
        %v580 = vadd.f32 0.0, %v579
        %v581 = vpop.f32.mrb[0].mxu0
        %582 = vmatprep.mubr.bf16.mxu0 0
        %583 = vmatmul.mubr.bf16.gmra.mrb[0].mxu0 %v421
        %v584 = vpop.f32.mrb[0].mxu0
        %v585 = vadd.f32 0.0, %v584
        %v586 = vpop.f32.mrb[0].mxu0
        %v587 = vpop.f32.mrb[0].mxu0
        %v588 = vadd.f32 0.0, %v587
        %v589 = vpop.f32.mrb[0].mxu0
        %590 = vmatprep.mubr.bf16.mxu0 0
        %591 = vmatmul.mubr.bf16.gmra.mrb[0].mxu0 %v424
        %v592 = vpop.f32.mrb[0].mxu0
        %v593 = vadd.f32 0.0, %v592
        %v594 = vpop.f32.mrb[0].mxu0
        %v595 = vpop.f32.mrb[0].mxu0
        %v596 = vadd.f32 0.0, %v595
        %v597 = vpop.f32.mrb[0].mxu0
        %598 = vmatprep.mubr.bf16.mxu0 0
        %599 = vmatmul.mubr.bf16.gmra.mrb[0].mxu0 %v427
        %v600 = vpop.f32.mrb[0].mxu0
        %v601 = vadd.f32 0.0, %v600
        %v602 = vpop.f32.mrb[0].mxu0
        %v603 = vpop.f32.mrb[0].mxu0
        %v604 = vadd.f32 0.0, %v603
        %v605 = vpop.f32.mrb[0].mxu0
        %606 = vmatprep.mubr.bf16.mxu0 0
        %607 = vmatmul.mubr.bf16.gmra.mrb[0].mxu0 %v430
        %v608 = vpop.f32.mrb[0].mxu0
        %v609 = vadd.f32 0.0, %v608
        %v610 = vpop.f32.mrb[0].mxu0
        %v611 = vpop.f32.mrb[0].mxu0
        %v612 = vadd.f32 0.0, %v611
        %v613 = vpop.f32.mrb[0].mxu0
        %614 = vmatprep.mubr.bf16.mxu0 0
        %615 = vmatmul.mubr.bf16.gmra.mrb[0].mxu0 %v433
        %v616 = vpop.f32.mrb[0].mxu0
        %v617 = vadd.f32 0.0, %v616
        %v618 = vpop.f32.mrb[0].mxu0
        %v619 = vpop.f32.mrb[0].mxu0
        %v620 = vadd.f32 0.0, %v619
        %v621 = vpop.f32.mrb[0].mxu0
        %622 = vmatprep.mubr.bf16.mxu0 0
        %623 = vmatmul.mubr.bf16.gmra.mrb[0].mxu0 %v436
        %v624 = vpop.f32.mrb[0].mxu0
        %v625 = vadd.f32 0.0, %v624
        %v626 = vpop.f32.mrb[0].mxu0
        %v627 = vpop.f32.mrb[0].mxu0
        %v628 = vadd.f32 0.0, %v627
        %v629 = vpop.f32.mrb[0].mxu0
        %630 = vmatprep.mubr.bf16.mxu0 0
        %631 = vmatmul.mubr.bf16.gmra.mrb[0].mxu0 %v439
        %v632 = vpop.f32.mrb[0].mxu0
        %v633 = vadd.f32 0.0, %v632
        %v634 = vpop.f32.mrb[0].mxu0
        %v635 = vpop.f32.mrb[0].mxu0
        %v636 = vadd.f32 0.0, %v635
        %v637 = vpop.f32.mrb[0].mxu0
        %638 = vmatprep.mubr.bf16.mxu0 0
        %639 = vmatmul.mubr.bf16.gmra.mrb[0].mxu0 %v442
        %v640 = vpop.f32.mrb[0].mxu0
        %v641 = vadd.f32 0.0, %v640
        %v642 = vpop.f32.mrb[0].mxu0
        %v643 = vpop.f32.mrb[0].mxu0
        %v644 = vadd.f32 0.0, %v643
        %v645 = vpop.f32.mrb[0].mxu0
        %646 = vmatprep.mubr.bf16.mxu0 0
        %647 = vmatmul.mubr.bf16.gmra.mrb[0].mxu0 %v445
        %v648 = vpop.f32.mrb[0].mxu0
        %v649 = vadd.f32 0.0, %v648
        %v650 = vpop.f32.mrb[0].mxu0
        %v651 = vpop.f32.mrb[0].mxu0
        %v652 = vadd.f32 0.0, %v651
        %v653 = vpop.f32.mrb[0].mxu0
        %654 = vmatprep.mubr.bf16.mxu0 0
        %655 = vmatmul.mubr.bf16.gmra.mrb[0].mxu0 %v448
        %v656 = vpop.f32.mrb[0].mxu0
        %v657 = vadd.f32 0.0, %v656
        %v658 = vpop.f32.mrb[0].mxu0
        %v659 = vpop.f32.mrb[0].mxu0
        %v660 = vadd.f32 0.0, %v659
        %v661 = vpop.f32.mrb[0].mxu0
        %662 = vmatprep.mubr.bf16.mxu0 0
        %663 = vmatmul.mubr.bf16.gmra.mrb[0].mxu0 %v451
        %v664 = vpop.f32.mrb[0].mxu0
        %v665 = vadd.f32 0.0, %v664
        %v666 = vpop.f32.mrb[0].mxu0
        %v667 = vpop.f32.mrb[0].mxu0
        %v668 = vadd.f32 0.0, %v667
        %v669 = vpop.f32.mrb[0].mxu0
        %670 = vmatprep.mubr.bf16.mxu0 0
        %671 = vmatmul.mubr.bf16.gmra.mrb[0].mxu0 %v454
        %v672 = vpop.f32.mrb[0].mxu0
        %v673 = vadd.f32 0.0, %v672
        %v674 = vpop.f32.mrb[0].mxu0
        %v675 = vpop.f32.mrb[0].mxu0
        %v676 = vadd.f32 0.0, %v675
        %v677 = vpop.f32.mrb[0].mxu0
        %678 = vmatprep.mubr.bf16.mxu0 0
        %679 = vmatmul.mubr.bf16.gmra.mrb[0].mxu0 %v457
        %v680 = vpop.f32.mrb[0].mxu0
        %v681 = vadd.f32 0.0, %v680
        %v682 = vpop.f32.mrb[0].mxu0
        %v683 = vpop.f32.mrb[0].mxu0
        %v684 = vadd.f32 0.0, %v683
        %v685 = vpop.f32.mrb[0].mxu0
        %686 = vmatprep.mubr.bf16.mxu0 0
        %687 = vmatmul.mubr.bf16.gmra.mrb[0].mxu0 %v460
        %v688 = vpop.f32.mrb[0].mxu0
        %v689 = vadd.f32 0.0, %v688
        %v690 = vpop.f32.mrb[0].mxu0
        %v691 = vpop.f32.mrb[0].mxu0
        %v692 = vpop.f32.mrb[0].mxu0
        %693 = vdwg.mxu0
        %s694 = scalar_lea.vmem [#allocation2], %s179
        %695 = vst [vmem:[%s694] sm:$0xff] %v497
        %696 = vst [vmem:[%s694 + $0x8] sm:$0xff] %v500
        %697 = vst [vmem:[%s694 + $0x10] sm:$0xff] %v505
        %698 = vst [vmem:[%s694 + $0x18] sm:$0xff] %v508
        %699 = vst [vmem:[%s694 + $0x20] sm:$0xff] %v513
        %700 = vst [vmem:[%s694 + $0x28] sm:$0xff] %v516
        %701 = vst [vmem:[%s694 + $0x30] sm:$0xff] %v521
        %702 = vst [vmem:[%s694 + $0x38] sm:$0xff] %v524
        %703 = vst [vmem:[%s694 + $0x40] sm:$0xff] %v529
        %704 = vst [vmem:[%s694 + $0x48] sm:$0xff] %v532
        %705 = vst [vmem:[%s694 + $0x50] sm:$0xff] %v537
        %706 = vst [vmem:[%s694 + $0x58] sm:$0xff] %v540
        %707 = vst [vmem:[%s694 + $0x60] sm:$0xff] %v545
        %708 = vst [vmem:[%s694 + $0x68] sm:$0xff] %v548
        %709 = vst [vmem:[%s694 + $0x70] sm:$0xff] %v553
        %710 = vst [vmem:[%s694 + $0x78] sm:$0xff] %v556
        %711 = vst [vmem:[%s694 + $0x80] sm:$0xff] %v561
        %712 = vst [vmem:[%s694 + $0x88] sm:$0xff] %v564
        %713 = vst [vmem:[%s694 + $0x90] sm:$0xff] %v569
        %714 = vst [vmem:[%s694 + $0x98] sm:$0xff] %v572
        %715 = vst [vmem:[%s694 + $0xa0] sm:$0xff] %v577
        %716 = vst [vmem:[%s694 + $0xa8] sm:$0xff] %v580
        %717 = vst [vmem:[%s694 + $0xb0] sm:$0xff] %v585
        %718 = vst [vmem:[%s694 + $0xb8] sm:$0xff] %v588
        %719 = vst [vmem:[%s694 + $0xc0] sm:$0xff] %v593
        %720 = vst [vmem:[%s694 + $0xc8] sm:$0xff] %v596
        %721 = vst [vmem:[%s694 + $0xd0] sm:$0xff] %v601
        %722 = vst [vmem:[%s694 + $0xd8] sm:$0xff] %v604
        %723 = vst [vmem:[%s694 + $0xe0] sm:$0xff] %v609
        %724 = vst [vmem:[%s694 + $0xe8] sm:$0xff] %v612
        %725 = vst [vmem:[%s694 + $0xf0] sm:$0xff] %v617
        %726 = vst [vmem:[%s694 + $0xf8] sm:$0xff] %v620
        %727 = vst [vmem:[%s694 + $0x100] sm:$0xff] %v625
        %728 = vst [vmem:[%s694 + $0x108] sm:$0xff] %v628
        %729 = vst [vmem:[%s694 + $0x110] sm:$0xff] %v633
        %730 = vst [vmem:[%s694 + $0x118] sm:$0xff] %v636
        %731 = vst [vmem:[%s694 + $0x120] sm:$0xff] %v641
        %732 = vst [vmem:[%s694 + $0x128] sm:$0xff] %v644
        %733 = vst [vmem:[%s694 + $0x130] sm:$0xff] %v649
        %734 = vst [vmem:[%s694 + $0x138] sm:$0xff] %v652
        %735 = vst [vmem:[%s694 + $0x140] sm:$0xff] %v657
        %736 = vst [vmem:[%s694 + $0x148] sm:$0xff] %v660
        %737 = vst [vmem:[%s694 + $0x150] sm:$0xff] %v665
        %738 = vst [vmem:[%s694 + $0x158] sm:$0xff] %v668
        %739 = vst [vmem:[%s694 + $0x160] sm:$0xff] %v673
        %740 = vst [vmem:[%s694 + $0x168] sm:$0xff] %v676
        %741 = vst [vmem:[%s694 + $0x170] sm:$0xff] %v681
        %742 = vst [vmem:[%s694 + $0x178] sm:$0xff] %v684
        %743 = vst [vmem:[%s694 + $0x180] sm:$0xff] %v689
        %v744 = vld [vmem:[#allocation3] sm:$0x1]
        %v745 = vadd.f32 %v497, %v500
        %v746 = vadd.f32 %v745, %v505
        %v747 = vadd.f32 %v746, %v508
        %v748 = vadd.f32 %v747, %v513
        %v749 = vadd.f32 %v748, %v516
        %v750 = vadd.f32 %v749, %v521
        %v751 = vadd.f32 %v750, %v524
        %v752 = vadd.f32 %v751, %v529
        %v753 = vadd.f32 %v752, %v532
        %v754 = vadd.f32 %v753, %v537
        %v755 = vadd.f32 %v754, %v540
        %v756 = vadd.f32 %v755, %v545
        %v757 = vadd.f32 %v756, %v548
        %v758 = vadd.f32 %v757, %v553
        %v759 = vadd.f32 %v758, %v556
        %v760 = vadd.f32 %v759, %v561
        %v761 = vadd.f32 %v760, %v564
        %v762 = vadd.f32 %v761, %v569
        %v763 = vadd.f32 %v762, %v572
        %v764 = vadd.f32 %v763, %v577
        %v765 = vadd.f32 %v764, %v580
        %v766 = vadd.f32 %v765, %v585
        %v767 = vadd.f32 %v766, %v588
        %v768 = vadd.f32 %v767, %v593
        %v769 = vadd.f32 %v768, %v596
        %v770 = vadd.f32 %v769, %v601
        %v771 = vadd.f32 %v770, %v604
        %v772 = vadd.f32 %v771, %v609
        %v773 = vadd.f32 %v772, %v612
        %v774 = vadd.f32 %v773, %v617
        %v775 = vadd.f32 %v774, %v620
        %v776 = vadd.f32 %v775, %v625
        %v777 = vadd.f32 %v776, %v628
        %v778 = vadd.f32 %v777, %v633
        %v779 = vadd.f32 %v778, %v636
        %v780 = vadd.f32 %v779, %v641
        %v781 = vadd.f32 %v780, %v644
        %v782 = vadd.f32 %v781, %v649
        %v783 = vadd.f32 %v782, %v652
        %v784 = vadd.f32 %v783, %v657
        %v785 = vadd.f32 %v784, %v660
        %v786 = vadd.f32 %v785, %v665
        %v787 = vadd.f32 %v786, %v668
        %v788 = vadd.f32 %v787, %v673
        %v789 = vadd.f32 %v788, %v676
        %v790 = vadd.f32 %v789, %v681
        %v791 = vadd.f32 %v790, %v684
        %v792 = vadd.f32 %v791, %v689
        %v793 = vrot.slane %v792, 4
        %v794 = vadd.f32 %v792, %v793
        %v795 = vrot.slane %v794, 2
        %v796 = vadd.f32 %v794, %v795
        %v797 = vrot.slane %v796, 1
        %v798 = vadd.f32 %v796, %v797
        %v799 = vadd.f32 %v744, %v798
        %800 = vst [vmem:[#allocation3] sm:$0x1] %v799
        %v801 = vld [vmem:[#allocation4] sm:$0x1]
        %v802 = vmul.f32 %v497, %v497
        %v803 = vmul.f32 %v500, %v500
        %v804 = vmul.f32 %v505, %v505
        %v805 = vmul.f32 %v508, %v508
        %v806 = vmul.f32 %v513, %v513
        %v807 = vmul.f32 %v516, %v516
        %v808 = vmul.f32 %v521, %v521
        %v809 = vmul.f32 %v524, %v524
        %v810 = vmul.f32 %v529, %v529
        %v811 = vmul.f32 %v532, %v532
        %v812 = vmul.f32 %v537, %v537
        %v813 = vmul.f32 %v540, %v540
        %v814 = vmul.f32 %v545, %v545
        %v815 = vmul.f32 %v548, %v548
        %v816 = vmul.f32 %v553, %v553
        %v817 = vmul.f32 %v556, %v556
        %v818 = vmul.f32 %v561, %v561
        %v819 = vmul.f32 %v564, %v564
        %v820 = vmul.f32 %v569, %v569
        %v821 = vmul.f32 %v572, %v572
        %v822 = vmul.f32 %v577, %v577
        %v823 = vmul.f32 %v580, %v580
        %v824 = vmul.f32 %v585, %v585
        %v825 = vmul.f32 %v588, %v588
        %v826 = vmul.f32 %v593, %v593
        %v827 = vmul.f32 %v596, %v596
        %v828 = vmul.f32 %v601, %v601
        %v829 = vmul.f32 %v604, %v604
        %v830 = vmul.f32 %v609, %v609
        %v831 = vmul.f32 %v612, %v612
        %v832 = vmul.f32 %v617, %v617
        %v833 = vmul.f32 %v620, %v620
        %v834 = vmul.f32 %v625, %v625
        %v835 = vmul.f32 %v628, %v628
        %v836 = vmul.f32 %v633, %v633
        %v837 = vmul.f32 %v636, %v636
        %v838 = vmul.f32 %v641, %v641
        %v839 = vmul.f32 %v644, %v644
        %v840 = vmul.f32 %v649, %v649
        %v841 = vmul.f32 %v652, %v652
        %v842 = vmul.f32 %v657, %v657
        %v843 = vmul.f32 %v660, %v660
        %v844 = vmul.f32 %v665, %v665
        %v845 = vmul.f32 %v668, %v668
        %v846 = vmul.f32 %v673, %v673
        %v847 = vmul.f32 %v676, %v676
        %v848 = vmul.f32 %v681, %v681
        %v849 = vmul.f32 %v684, %v684
        %v850 = vmul.f32 %v689, %v689
        %v851 = vadd.f32 %v802, %v803
        %v852 = vadd.f32 %v851, %v804
        %v853 = vadd.f32 %v852, %v805
        %v854 = vadd.f32 %v853, %v806
        %v855 = vadd.f32 %v854, %v807
        %v856 = vadd.f32 %v855, %v808
        %v857 = vadd.f32 %v856, %v809
        %v858 = vadd.f32 %v857, %v810
        %v859 = vadd.f32 %v858, %v811
        %v860 = vadd.f32 %v859, %v812
        %v861 = vadd.f32 %v860, %v813
        %v862 = vadd.f32 %v861, %v814
        %v863 = vadd.f32 %v862, %v815
        %v864 = vadd.f32 %v863, %v816
        %v865 = vadd.f32 %v864, %v817
        %v866 = vadd.f32 %v865, %v818
        %v867 = vadd.f32 %v866, %v819
        %v868 = vadd.f32 %v867, %v820
        %v869 = vadd.f32 %v868, %v821
        %v870 = vadd.f32 %v869, %v822
        %v871 = vadd.f32 %v870, %v823
        %v872 = vadd.f32 %v871, %v824
        %v873 = vadd.f32 %v872, %v825
        %v874 = vadd.f32 %v873, %v826
        %v875 = vadd.f32 %v874, %v827
        %v876 = vadd.f32 %v875, %v828
        %v877 = vadd.f32 %v876, %v829
        %v878 = vadd.f32 %v877, %v830
        %v879 = vadd.f32 %v878, %v831
        %v880 = vadd.f32 %v879, %v832
        %v881 = vadd.f32 %v880, %v833
        %v882 = vadd.f32 %v881, %v834
        %v883 = vadd.f32 %v882, %v835
        %v884 = vadd.f32 %v883, %v836
        %v885 = vadd.f32 %v884, %v837
        %v886 = vadd.f32 %v885, %v838
        %v887 = vadd.f32 %v886, %v839
        %v888 = vadd.f32 %v887, %v840
        %v889 = vadd.f32 %v888, %v841
        %v890 = vadd.f32 %v889, %v842
        %v891 = vadd.f32 %v890, %v843
        %v892 = vadd.f32 %v891, %v844
        %v893 = vadd.f32 %v892, %v845
        %v894 = vadd.f32 %v893, %v846
        %v895 = vadd.f32 %v894, %v847
        %v896 = vadd.f32 %v895, %v848
        %v897 = vadd.f32 %v896, %v849
        %v898 = vadd.f32 %v897, %v850
        %v899 = vrot.slane %v898, 4
        %v900 = vadd.f32 %v898, %v899
        %v901 = vrot.slane %v900, 2
        %v902 = vadd.f32 %v900, %v901
        %v903 = vrot.slane %v902, 1
        %v904 = vadd.f32 %v902, %v903
        %v905 = vadd.f32 %v801, %v904
        %906 = vst [vmem:[#allocation4] sm:$0x1] %v905
      $region32: #{conv_bn_block.1} parent=27 // pred_fallthru
        _
      %p907 = scmp.eq.s32.totalorder %s17, 1
      // Predicated region
      $region37: #{conv_bn_block.1} parent=27 // pred_check
        %p908 = pneg %p907
      $region38: #{conv_bn_block.1} parent=27 // pred_check_branch
        %910 = sbr.rel (%p908) target = $region40
      $region39: #{conv_bn_block.1} parent=27 // pred_region
        %p911 = scmp.eq.s32.totalorder %s18, 0
        // Predicated region
        $region41: #{conv_bn_block.1} parent=39 // pred_check
          %p912 = pneg %p911
        $region42: #{conv_bn_block.1} parent=39 // pred_check_branch
          %914 = sbr.rel (%p912) target = $region44
        $region43: #{conv_bn_block.1} parent=39 // pred_region
          %v915 = vld [vmem:[#allocation3] sm:$0x1]
          %v916 = vmul.f32 %v915, 0.0025510204
          %v917 = vld [vmem:[#allocation4] sm:$0x1]
          %v918 = vmul.f32 %v917, 0.0025510204
          %v919 = vmul.f32 %v916, %v916
          %v920 = vsub.f32 %v918, %v919
          %v921 = vmax.f32 %v920, 0.0
          %v922 = vadd.f32 %v921, 1e-05
          %v923 = vrsqrt.pop %v922
          %924 = vst [vmem:[#allocation5] sm:$0x1] %v923
          %v925 = vsub.f32 0.0, %v916
          %v926 = vmul.f32 %v925, %v923
          %927 = vst [vmem:[#allocation6] sm:$0x1] %v926
        $region44: #{conv_bn_block.1} parent=39 // pred_fallthru
          _
        %s928 = scalar_lea.vmem [#allocation2], %s179
        %v929 = vld [vmem:[%s928] sm:$0xff]
        %v930 = vld [vmem:[%s928 + $0x8] sm:$0xff]
        %v931 = vld [vmem:[%s928 + $0x10] sm:$0xff]
        %v932 = vld [vmem:[%s928 + $0x18] sm:$0xff]
        %v933 = vld [vmem:[%s928 + $0x20] sm:$0xff]
        %v934 = vld [vmem:[%s928 + $0x28] sm:$0xff]
        %v935 = vld [vmem:[%s928 + $0x30] sm:$0xff]
        %v936 = vld [vmem:[%s928 + $0x38] sm:$0xff]
        %v937 = vld [vmem:[%s928 + $0x40] sm:$0xff]
        %v938 = vld [vmem:[%s928 + $0x48] sm:$0xff]
        %v939 = vld [vmem:[%s928 + $0x50] sm:$0xff]
        %v940 = vld [vmem:[%s928 + $0x58] sm:$0xff]
        %v941 = vld [vmem:[%s928 + $0x60] sm:$0xff]
        %v942 = vld [vmem:[%s928 + $0x68] sm:$0xff]
        %v943 = vld [vmem:[%s928 + $0x70] sm:$0xff]
        %v944 = vld [vmem:[%s928 + $0x78] sm:$0xff]
        %v945 = vld [vmem:[%s928 + $0x80] sm:$0xff]
        %v946 = vld [vmem:[%s928 + $0x88] sm:$0xff]
        %v947 = vld [vmem:[%s928 + $0x90] sm:$0xff]
        %v948 = vld [vmem:[%s928 + $0x98] sm:$0xff]
        %v949 = vld [vmem:[%s928 + $0xa0] sm:$0xff]
        %v950 = vld [vmem:[%s928 + $0xa8] sm:$0xff]
        %v951 = vld [vmem:[%s928 + $0xb0] sm:$0xff]
        %v952 = vld [vmem:[%s928 + $0xb8] sm:$0xff]
        %v953 = vld [vmem:[%s928 + $0xc0] sm:$0xff]
        %v954 = vld [vmem:[%s928 + $0xc8] sm:$0xff]
        %v955 = vld [vmem:[%s928 + $0xd0] sm:$0xff]
        %v956 = vld [vmem:[%s928 + $0xd8] sm:$0xff]
        %v957 = vld [vmem:[%s928 + $0xe0] sm:$0xff]
        %v958 = vld [vmem:[%s928 + $0xe8] sm:$0xff]
        %v959 = vld [vmem:[%s928 + $0xf0] sm:$0xff]
        %v960 = vld [vmem:[%s928 + $0xf8] sm:$0xff]
        %v961 = vld [vmem:[%s928 + $0x100] sm:$0xff]
        %v962 = vld [vmem:[%s928 + $0x108] sm:$0xff]
        %v963 = vld [vmem:[%s928 + $0x110] sm:$0xff]
        %v964 = vld [vmem:[%s928 + $0x118] sm:$0xff]
        %v965 = vld [vmem:[%s928 + $0x120] sm:$0xff]
        %v966 = vld [vmem:[%s928 + $0x128] sm:$0xff]
        %v967 = vld [vmem:[%s928 + $0x130] sm:$0xff]
        %v968 = vld [vmem:[%s928 + $0x138] sm:$0xff]
        %v969 = vld [vmem:[%s928 + $0x140] sm:$0xff]
        %v970 = vld [vmem:[%s928 + $0x148] sm:$0xff]
        %v971 = vld [vmem:[%s928 + $0x150] sm:$0xff]
        %v972 = vld [vmem:[%s928 + $0x158] sm:$0xff]
        %v973 = vld [vmem:[%s928 + $0x160] sm:$0xff]
        %v974 = vld [vmem:[%s928 + $0x168] sm:$0xff]
        %v975 = vld [vmem:[%s928 + $0x170] sm:$0xff]
        %v976 = vld [vmem:[%s928 + $0x178] sm:$0xff]
        %v977 = vld [vmem:[%s928 + $0x180] sm:$0xff]
        %v978 = vld [vmem:[#allocation5] sm:$0x1]
        %v980 = vlaneseq
        %v981 = vshrl.u32 %v980, 7
        %v982 = vsub.s32 0, %v981
        %v983 = vrot.slane %v978, %v982
        %v985 = vmul.f32 %v929, %v983
        %v986 = vmul.f32 %v930, %v983
        %v987 = vmul.f32 %v931, %v983
        %v988 = vmul.f32 %v932, %v983
        %v989 = vmul.f32 %v933, %v983
        %v990 = vmul.f32 %v934, %v983
        %v991 = vmul.f32 %v935, %v983
        %v992 = vmul.f32 %v936, %v983
        %v993 = vmul.f32 %v937, %v983
        %v994 = vmul.f32 %v938, %v983
        %v995 = vmul.f32 %v939, %v983
        %v996 = vmul.f32 %v940, %v983
        %v997 = vmul.f32 %v941, %v983
        %v998 = vmul.f32 %v942, %v983
        %v999 = vmul.f32 %v943, %v983
        %v1000 = vmul.f32 %v944, %v983
        %v1001 = vmul.f32 %v945, %v983
        %v1002 = vmul.f32 %v946, %v983
        %v1003 = vmul.f32 %v947, %v983
        %v1004 = vmul.f32 %v948, %v983
        %v1005 = vmul.f32 %v949, %v983
        %v1006 = vmul.f32 %v950, %v983
        %v1007 = vmul.f32 %v951, %v983
        %v1008 = vmul.f32 %v952, %v983
        %v1009 = vmul.f32 %v953, %v983
        %v1010 = vmul.f32 %v954, %v983
        %v1011 = vmul.f32 %v955, %v983
        %v1012 = vmul.f32 %v956, %v983
        %v1013 = vmul.f32 %v957, %v983
        %v1014 = vmul.f32 %v958, %v983
        %v1015 = vmul.f32 %v959, %v983
        %v1016 = vmul.f32 %v960, %v983
        %v1017 = vmul.f32 %v961, %v983
        %v1018 = vmul.f32 %v962, %v983
        %v1019 = vmul.f32 %v963, %v983
        %v1020 = vmul.f32 %v964, %v983
        %v1021 = vmul.f32 %v965, %v983
        %v1022 = vmul.f32 %v966, %v983
        %v1023 = vmul.f32 %v967, %v983
        %v1024 = vmul.f32 %v968, %v983
        %v1025 = vmul.f32 %v969, %v983
        %v1026 = vmul.f32 %v970, %v983
        %v1027 = vmul.f32 %v971, %v983
        %v1028 = vmul.f32 %v972, %v983
        %v1029 = vmul.f32 %v973, %v983
        %v1030 = vmul.f32 %v974, %v983
        %v1031 = vmul.f32 %v975, %v983
        %v1032 = vmul.f32 %v976, %v983
        %v1033 = vmul.f32 %v977, %v983
        %v1034 = vld [vmem:[#allocation6] sm:$0x1]
        %v1036 = vlaneseq
        %v1037 = vshrl.u32 %v1036, 7
        %v1038 = vsub.s32 0, %v1037
        %v1039 = vrot.slane %v1034, %v1038
        %v1041 = vadd.f32 %v985, %v1039
        %v1042 = vadd.f32 %v986, %v1039
        %v1043 = vadd.f32 %v987, %v1039
        %v1044 = vadd.f32 %v988, %v1039
        %v1045 = vadd.f32 %v989, %v1039
        %v1046 = vadd.f32 %v990, %v1039
        %v1047 = vadd.f32 %v991, %v1039
        %v1048 = vadd.f32 %v992, %v1039
        %v1049 = vadd.f32 %v993, %v1039
        %v1050 = vadd.f32 %v994, %v1039
        %v1051 = vadd.f32 %v995, %v1039
        %v1052 = vadd.f32 %v996, %v1039
        %v1053 = vadd.f32 %v997, %v1039
        %v1054 = vadd.f32 %v998, %v1039
        %v1055 = vadd.f32 %v999, %v1039
        %v1056 = vadd.f32 %v1000, %v1039
        %v1057 = vadd.f32 %v1001, %v1039
        %v1058 = vadd.f32 %v1002, %v1039
        %v1059 = vadd.f32 %v1003, %v1039
        %v1060 = vadd.f32 %v1004, %v1039
        %v1061 = vadd.f32 %v1005, %v1039
        %v1062 = vadd.f32 %v1006, %v1039
        %v1063 = vadd.f32 %v1007, %v1039
        %v1064 = vadd.f32 %v1008, %v1039
        %v1065 = vadd.f32 %v1009, %v1039
        %v1066 = vadd.f32 %v1010, %v1039
        %v1067 = vadd.f32 %v1011, %v1039
        %v1068 = vadd.f32 %v1012, %v1039
        %v1069 = vadd.f32 %v1013, %v1039
        %v1070 = vadd.f32 %v1014, %v1039
        %v1071 = vadd.f32 %v1015, %v1039
        %v1072 = vadd.f32 %v1016, %v1039
        %v1073 = vadd.f32 %v1017, %v1039
        %v1074 = vadd.f32 %v1018, %v1039
        %v1075 = vadd.f32 %v1019, %v1039
        %v1076 = vadd.f32 %v1020, %v1039
        %v1077 = vadd.f32 %v1021, %v1039
        %v1078 = vadd.f32 %v1022, %v1039
        %v1079 = vadd.f32 %v1023, %v1039
        %v1080 = vadd.f32 %v1024, %v1039
        %v1081 = vadd.f32 %v1025, %v1039
        %v1082 = vadd.f32 %v1026, %v1039
        %v1083 = vadd.f32 %v1027, %v1039
        %v1084 = vadd.f32 %v1028, %v1039
        %v1085 = vadd.f32 %v1029, %v1039
        %v1086 = vadd.f32 %v1030, %v1039
        %v1087 = vadd.f32 %v1031, %v1039
        %v1088 = vadd.f32 %v1032, %v1039
        %v1089 = vadd.f32 %v1033, %v1039
        %1090 = vst [vmem:[%s175] sm:$0xff] %v1041
        %1091 = vst [vmem:[%s175 + $0x8] sm:$0xff] %v1042
        %1092 = vst [vmem:[%s175 + $0x10] sm:$0xff] %v1043
        %1093 = vst [vmem:[%s175 + $0x18] sm:$0xff] %v1044
        %1094 = vst [vmem:[%s175 + $0x20] sm:$0xff] %v1045
        %1095 = vst [vmem:[%s175 + $0x28] sm:$0xff] %v1046
        %1096 = vst [vmem:[%s175 + $0x30] sm:$0xff] %v1047
        %1097 = vst [vmem:[%s175 + $0x38] sm:$0xff] %v1048
        %1098 = vst [vmem:[%s175 + $0x40] sm:$0xff] %v1049
        %1099 = vst [vmem:[%s175 + $0x48] sm:$0xff] %v1050
        %1100 = vst [vmem:[%s175 + $0x50] sm:$0xff] %v1051
        %1101 = vst [vmem:[%s175 + $0x58] sm:$0xff] %v1052
        %1102 = vst [vmem:[%s175 + $0x60] sm:$0xff] %v1053
        %1103 = vst [vmem:[%s175 + $0x68] sm:$0xff] %v1054
        %1104 = vst [vmem:[%s175 + $0x70] sm:$0xff] %v1055
        %1105 = vst [vmem:[%s175 + $0x78] sm:$0xff] %v1056
        %1106 = vst [vmem:[%s175 + $0x80] sm:$0xff] %v1057
        %1107 = vst [vmem:[%s175 + $0x88] sm:$0xff] %v1058
        %1108 = vst [vmem:[%s175 + $0x90] sm:$0xff] %v1059
        %1109 = vst [vmem:[%s175 + $0x98] sm:$0xff] %v1060
        %1110 = vst [vmem:[%s175 + $0xa0] sm:$0xff] %v1061
        %1111 = vst [vmem:[%s175 + $0xa8] sm:$0xff] %v1062
        %1112 = vst [vmem:[%s175 + $0xb0] sm:$0xff] %v1063
        %1113 = vst [vmem:[%s175 + $0xb8] sm:$0xff] %v1064
        %1114 = vst [vmem:[%s175 + $0xc0] sm:$0xff] %v1065
        %1115 = vst [vmem:[%s175 + $0xc8] sm:$0xff] %v1066
        %1116 = vst [vmem:[%s175 + $0xd0] sm:$0xff] %v1067
        %1117 = vst [vmem:[%s175 + $0xd8] sm:$0xff] %v1068
        %1118 = vst [vmem:[%s175 + $0xe0] sm:$0xff] %v1069
        %1119 = vst [vmem:[%s175 + $0xe8] sm:$0xff] %v1070
        %1120 = vst [vmem:[%s175 + $0xf0] sm:$0xff] %v1071
        %1121 = vst [vmem:[%s175 + $0xf8] sm:$0xff] %v1072
        %1122 = vst [vmem:[%s175 + $0x100] sm:$0xff] %v1073
        %1123 = vst [vmem:[%s175 + $0x108] sm:$0xff] %v1074
        %1124 = vst [vmem:[%s175 + $0x110] sm:$0xff] %v1075
        %1125 = vst [vmem:[%s175 + $0x118] sm:$0xff] %v1076
        %1126 = vst [vmem:[%s175 + $0x120] sm:$0xff] %v1077
        %1127 = vst [vmem:[%s175 + $0x128] sm:$0xff] %v1078
        %1128 = vst [vmem:[%s175 + $0x130] sm:$0xff] %v1079
        %1129 = vst [vmem:[%s175 + $0x138] sm:$0xff] %v1080
        %1130 = vst [vmem:[%s175 + $0x140] sm:$0xff] %v1081
        %1131 = vst [vmem:[%s175 + $0x148] sm:$0xff] %v1082
        %1132 = vst [vmem:[%s175 + $0x150] sm:$0xff] %v1083
        %1133 = vst [vmem:[%s175 + $0x158] sm:$0xff] %v1084
        %1134 = vst [vmem:[%s175 + $0x160] sm:$0xff] %v1085
        %1135 = vst [vmem:[%s175 + $0x168] sm:$0xff] %v1086
        %1136 = vst [vmem:[%s175 + $0x170] sm:$0xff] %v1087
        %1137 = vst [vmem:[%s175 + $0x178] sm:$0xff] %v1088
        %1138 = vst [vmem:[%s175 + $0x180] sm:$0xff] %v1089
      $region40: #{conv_bn_block.1} parent=27 // pred_fallthru
        _
      %s1139 = smul.u32 %s18, %s17
      %s1140 = smul.u32 49, %s1139
      %p1141 = scmp.lt.s32.totalorder %s1140, 48
      %s1142 = scalar_select %p1141, %s1140, 48
      %s1143 = smul.addr %s1142, 8
      %s1144 = scalar_lea.vmem %s2, %s1143
      // Predicated region
      $region45: #{conv_bn_block.1} parent=27 // pred_check
        %p1145 = pneg %p96
      $region46: #{conv_bn_block.1} parent=27 // pred_check_branch
        %1147 = sbr.rel (%p1145) target = $region48
      $region47: #{conv_bn_block.1} parent=27 // pred_region
        %s1148 = smul.u32 %s18, %s17
        %s1149 = smul.u32 49, %s1148
      $region48: #{conv_bn_block.1} parent=27 // pred_fallthru
        _
    $region28: #{conv_bn_block.1} parent=5 // pred_fallthru
      _
    %p1150 = scmp.le.s32.totalorder 2, %s8
    // Predicated region
    $region49: #{conv_bn_block.1} parent=5 // pred_check
      %p1151 = pneg %p1150
    $region50: #{conv_bn_block.1} parent=5 // pred_check_branch
      %1153 = sbr.rel (%p1151) target = $region52
    $region51: #{conv_bn_block.1} parent=5 // pred_region
      %s1154 = ssub.s32 %s8, 2
      // Predicated region
      $region53: #{conv_bn_block.1} parent=51 // pred_check
        %p1155 = pneg %p102
      $region54: #{conv_bn_block.1} parent=51 // pred_check_branch
        %1157 = sbr.rel (%p1155) target = $region56
      $region55: #{conv_bn_block.1} parent=51 // pred_region
        %s1158 = smul.u32 %s20, %s19
        %s1159 = smul.u32 49, %s1158
        %p1160 = scmp.lt.s32.totalorder %s1159, 48
        %s1161 = scalar_select %p1160, %s1159, 48
        %s1162 = smul.addr %s1161, 8
        %s1163 = scalar_lea.vmem %s2, %s1162
      $region56: #{conv_bn_block.1} parent=51 // pred_fallthru
        _
    $region52: #{conv_bn_block.1} parent=5 // pred_fallthru
      _
  $region6: #{conv_bn_block.1} parent=0 // loop_footer
    %s12 = sadd.s32 1, %s8
  $region7: #{conv_bn_block.1} parent=0 // loop_footer_branch
    %7 = sbr.rel target = $region3
  $region8: #{conv_bn_block.1} parent=0 // loop_exit
    _

</llo_original>
